<compile_context>
chip_gen: v5e
topology: v5e:2x2
jax: 0.10.0
libtpu: 0.0.40
codegen_flags: <defaults>
</compile_context>

<pallas_src>
import functools

import jax
import jax.numpy as jnp
from jax.experimental import pallas as pl
from jax.experimental.pallas import tpu as pltpu


def _round_up(x: int, m: int) -> int:
    return ((x + m - 1) // m) * m


def _choose_tile_n(n: int, c: int, itemsize: int,
                   vmem_budget: int = 16 * 1024 * 1024,
                   max_tile: int = 1024) -> int:
    """Largest batch tile that keeps the pipelined working set under budget."""
    # Double-buffered input tile (input dtype) + a few f32 temporaries
    # (x cast, exp(x - m), masked gather) materialised per tile.
    per_row = c * (2 * itemsize + 3 * 4)
    tile = vmem_budget // max(per_row, 1)
    tile = min(tile, max_tile, _round_up(n, 16))
    # Multiple of 16 covers both f32 (sublane 8) and bf16 (sublane 16) packing.
    tile = max(16, (tile // 16) * 16)
    return tile


def _ce_rows_kernel(logits_ref, target_ref, ce_ref, *, n_rows: int, tile_n: int):
    """Per-row cross entropy for one batch tile; padded rows are zeroed."""
    pid = pl.program_id(0)

    x = logits_ref[...].astype(jnp.float32)            # (TILE_N, C) f32
    t = target_ref[...]                                 # (TILE_N, 1) int32

    # logsumexp over classes (lane axis).
    m = jnp.max(x, axis=-1, keepdims=True)              # (TILE_N, 1)
    lse = m + jnp.log(jnp.sum(jnp.exp(x - m), axis=-1, keepdims=True))

    # Gather the target logit via an iota mask (no dynamic gather on TPU).
    col = jax.lax.broadcasted_iota(jnp.int32, x.shape, 1)
    tgt_logit = jnp.sum(jnp.where(col == t, x, 0.0), axis=-1, keepdims=True)

    per_sample = lse - tgt_logit                         # (TILE_N, 1)

    # Mask rows beyond the true batch size (last partial tile reads garbage).
    row = jax.lax.broadcasted_iota(jnp.int32, per_sample.shape, 0) + pid * tile_n
    per_sample = jnp.where(row < n_rows, per_sample, 0.0)

    ce_ref[...] = per_sample


def focal_loss(logits: jax.Array, target: jax.Array, gamma: float = 0.0) -> jax.Array:
    """FocalLoss.forward: logits (N, C), target (N,) int -> scalar f32."""
    n, c = logits.shape
    target2d = target.astype(jnp.int32).reshape(n, 1)

    itemsize = jnp.dtype(logits.dtype).itemsize
    tile_n = _choose_tile_n(n, c, itemsize)
    grid = (pl.cdiv(n, tile_n),)

    kernel = functools.partial(_ce_rows_kernel, n_rows=n, tile_n=tile_n)

    per_sample = pl.pallas_call(
        kernel,
        out_shape=jax.ShapeDtypeStruct((n, 1), jnp.float32),
        grid=grid,
        in_specs=[
            pl.BlockSpec((tile_n, c), lambda i: (i, 0)),
            pl.BlockSpec((tile_n, 1), lambda i: (i, 0)),
        ],
        out_specs=pl.BlockSpec((tile_n, 1), lambda i: (i, 0)),
        compiler_params=pltpu.CompilerParams(
            dimension_semantics=("parallel",),       # independent tiles -> megacore-friendly
            vmem_limit_bytes=32 * 1024 * 1024,       # explicit; safe on v5e/v6e/v7x
        ),
    )(logits, target2d)

    # Tiny scalar epilogue (matches torch: CE mean first, then focal modulation).
    logp = jnp.sum(per_sample) / jnp.float32(n)
    if float(gamma) == 0.0:
        return logp                                   # (1 - p)**0 == 1; avoids pow(0, 0) edge
    p = jnp.exp(-logp)
    return ((1.0 - p) ** jnp.float32(gamma)) * logp


def _focal_loss_ref(logits, target, gamma=0.0):
    # Pure-JAX reference mirroring the PyTorch module.
    x = logits.astype(jnp.float32)
    lse = jax.scipy.special.logsumexp(x, axis=-1)
    tgt = jnp.take_along_axis(x, target[:, None].astype(jnp.int32), axis=-1)[:, 0]
    logp = jnp.mean(lse - tgt)
    p = jnp.exp(-logp)
    return ((1.0 - p) ** gamma) * logp


if __name__ == "__main__":
    key = jax.random.PRNGKey(0)

    # Case 1: module-default gamma=0, f32 logits, N multiple of tile.
    k1, k2, k3, k4 = jax.random.split(key, 4)
    N1, C1 = 8, 32
    logits1 = jax.random.normal(k1, (N1, C1), dtype=jnp.float32)
    target1 = jax.random.randint(k2, (N1,), 0, C1, dtype=jnp.int32)
    out1 = focal_loss(logits1, target1, gamma=0.0)
    jax.block_until_ready(out1)
    ref1 = _focal_loss_ref(logits1, target1, gamma=0.0)
    assert jnp.allclose(out1, ref1, atol=1e-5, rtol=1e-5), (out1, ref1)

    # Case 2: gamma=2, bf16 logits streamed narrow, N not a multiple of the
    # tile (exercises the padded-row mask).
    N2, C2 = 20, 48
    logits2 = jax.random.normal(k3, (N2, C2), dtype=jnp.float32).astype(jnp.bfloat16)
    target2 = jax.random.randint(k4, (N2,), 0, C2, dtype=jnp.int32)
    out2 = focal_loss(logits2, target2, gamma=2.0)
    jax.block_until_ready(out2)
    ref2 = _focal_loss_ref(logits2, target2, gamma=2.0)
    assert jnp.allclose(out2, ref2, atol=1e-5, rtol=1e-5), (out2, ref2)

    print("KERNEL_OK")
</pallas_src>

<mosaic_0001>
module attributes {stable_mosaic.version = 11 : i64} {
  func.func @_ce_rows_kernel(%arg0: i32, %arg1: memref<16x32xf32, #tpu.memory_space<vmem>>, %arg2: memref<16x1xi32, #tpu.memory_space<vmem>>, %arg3: memref<16x1xf32, #tpu.memory_space<vmem>>) attributes {dimension_semantics = [#tpu.dimension_semantics<parallel>], iteration_bounds = array<i64: 1>, scalar_prefetch = 0 : i64, scratch_operands = 0 : i64, tpu.core_type = #tpu.core_type<tc>, window_params = [{transform_indices = @transform_0, window_bounds = array<i64: 16, 32>}, {transform_indices = @transform_1, window_bounds = array<i64: 16, 1>}, {transform_indices = @transform_2, window_bounds = array<i64: 16, 1>}]} {
    %c0 = arith.constant 0 : index
    %c0_0 = arith.constant 0 : index
    %0 = vector.load %arg1[%c0, %c0_0] : memref<16x32xf32, #tpu.memory_space<vmem>>, vector<16x32xf32>
    %c0_1 = arith.constant 0 : index
    %c0_2 = arith.constant 0 : index
    %1 = vector.load %arg2[%c0_1, %c0_2] : memref<16x1xi32, #tpu.memory_space<vmem>>, vector<16x1xi32>
    %cst = arith.constant dense<0xFF800000> : vector<16xf32>
    %2 = vector.multi_reduction <maximumf>, %0, %cst [1] : vector<16x32xf32> to vector<16xf32>
    %3 = vector.shape_cast %2 : vector<16xf32> to vector<16x1xf32>
    %4 = vector.broadcast %3 : vector<16x1xf32> to vector<16x32xf32>
    %5 = arith.subf %0, %4 : vector<16x32xf32>
    %6 = math.exp %5 : vector<16x32xf32>
    %cst_3 = arith.constant dense<0.000000e+00> : vector<16xf32>
    %7 = vector.multi_reduction <add>, %6, %cst_3 [1] : vector<16x32xf32> to vector<16xf32>
    %8 = vector.shape_cast %7 : vector<16xf32> to vector<16x1xf32>
    %9 = math.log %8 : vector<16x1xf32>
    %10 = arith.addf %3, %9 : vector<16x1xf32>
    %11 = tpu.iota {dimensions = array<i32: 1>} : vector<16x32xi32>
    %12 = vector.broadcast %1 : vector<16x1xi32> to vector<16x32xi32>
    %13 = arith.cmpi eq, %11, %12 : vector<16x32xi32>
    %cst_4 = arith.constant 0.000000e+00 : f32
    %14 = vector.broadcast %cst_4 : f32 to vector<16x32xf32>
    %15 = arith.select %13, %0, %14 : vector<16x32xi1>, vector<16x32xf32>
    %cst_5 = arith.constant dense<0.000000e+00> : vector<16xf32>
    %16 = vector.multi_reduction <add>, %15, %cst_5 [1] : vector<16x32xf32> to vector<16xf32>
    %17 = vector.shape_cast %16 : vector<16xf32> to vector<16x1xf32>
    %18 = arith.subf %10, %17 : vector<16x1xf32>
    %19 = tpu.iota {dimensions = array<i32: 0>} : vector<16x1xi32>
    %c16_i32 = arith.constant 16 : i32
    %20 = arith.muli %arg0, %c16_i32 : i32
    %21 = vector.broadcast %20 : i32 to vector<16x1xi32>
    %22 = arith.addi %19, %21 : vector<16x1xi32>
    %c8_i32 = arith.constant 8 : i32
    %23 = vector.broadcast %c8_i32 : i32 to vector<16x1xi32>
    %24 = arith.cmpi slt, %22, %23 : vector<16x1xi32>
    %cst_6 = arith.constant 0.000000e+00 : f32
    %25 = vector.broadcast %cst_6 : f32 to vector<16x1xf32>
    %26 = arith.select %24, %18, %25 : vector<16x1xi1>, vector<16x1xf32>
    %c0_7 = arith.constant 0 : index
    %c0_8 = arith.constant 0 : index
    %27 = vector.load %arg3[%c0_7, %c0_8] : memref<16x1xf32, #tpu.memory_space<vmem>>, vector<16x1xf32>
    tpu.vector_store %arg3[%c0_7, %c0_8], %26 {strides = array<i32>} : memref<16x1xf32, #tpu.memory_space<vmem>>, vector<16x1xf32>,
    return
  }
  func.func @transform_0(%arg0: i32) -> (i32, i32) {
    %c0_i32 = arith.constant 0 : i32
    %c0_i32_0 = arith.constant 0 : i32
    return %arg0, %c0_i32 : i32, i32
  }
  func.func @transform_1(%arg0: i32) -> (i32, i32) {
    %c0_i32 = arith.constant 0 : i32
    %c0_i32_0 = arith.constant 0 : i32
    return %arg0, %c0_i32 : i32, i32
  }
  func.func @transform_2(%arg0: i32) -> (i32, i32) {
    %c0_i32 = arith.constant 0 : i32
    %c0_i32_0 = arith.constant 0 : i32
    return %arg0, %c0_i32 : i32, i32
  }
}

</mosaic_0001>

<llo_original>
// kernel: tpu_custom_call.1
$region0: #{tpu_custom_call.1}
  #allocation0 [shape = 'u32[]', space=smem, size = 0x4, offset = 0x4, fixed_abs, tag = 'smem constant byte address 0x4 - core index']
  #allocation1 [shape = 'u32[72,128]{1,0:T(1,128)}', space=vmem, size = 0x9000, scoped, tag = 'internal scratch']
  %s0 = inlined_call_operand.vmem [shape: f32[8,32], index: 0, kind: input, shape index: {}]
  %s1 = inlined_call_operand.vmem [shape: s32[8,1], index: 1, kind: input, shape index: {}]
  %s2 = inlined_call_operand.vmem [shape: f32[8,1], index: 2, kind: output, shape index: {}]
  %s3 = sld [smem:[#allocation0]]
  $region52: #{tpu_custom_call.1} parent=0
    _
  %s5 = ssub.s32 1, %s3
  %s6 = scalar_select 0, %s5, %s3
  $region1: #{tpu_custom_call.1} parent=0
    #allocation2 [shape = 'u8[8192]{0}', space=vmem, size = 0x2000, scoped, tag = 'output window, operand 0, single buffered']
    // Predicated region
    $region2: #{tpu_custom_call.1} parent=1 // pred_check
      _
    $region3: #{tpu_custom_call.1} parent=1 // pred_check_branch
      %8 = sbr.rel (0) target = $region5
    $region4: #{tpu_custom_call.1} parent=1 // pred_region
      _
    $region5: #{tpu_custom_call.1} parent=1 // pred_fallthru
      _
    // Predicated region
    $region6: #{tpu_custom_call.1} parent=1 // pred_check
      _
    $region7: #{tpu_custom_call.1} parent=1 // pred_check_branch
      %10 = sbr.rel (0) target = $region9
    $region8: #{tpu_custom_call.1} parent=1 // pred_region
      _
    $region9: #{tpu_custom_call.1} parent=1 // pred_fallthru
      _
    %v11 = vld [vmem:[%s0] sm:$0xff]
    %v12 = vld [vmem:[%s0 + $0x8] sm:$0xff]
    %v13 = vld [vmem:[%s1] sm:$0xff]
    %v14 = vld [vmem:[%s1 + $0x8] sm:$0xff]
    %vm15 = vcmask 261120
    %v16 = vsel %vm15, %v11, -inf
    %17 = vmax.xlane.f32.xlu0 %v16
    %v18 = vpop.xlane.xlu0 %17
    %v19 = vsel %vm15, %v12, -inf
    %20 = vmax.xlane.f32.xlu0 %v19
    %v21 = vpop.xlane.xlu0 %20
    %v22 = vsub.f32 %v11, %v18
    %v23 = vsub.f32 %v12, %v21
    %v24 = vmul.f32 %v22, 1.442695
    %v25 = vpow.pop %v24
    %v26 = vmul.f32 %v23, 1.442695
    %v27 = vpow.pop %v26
    %v28 = vsel %vm15, %v25, 0.0
    %29 = vadd.xlane.f32.xlu0 %v28
    %v30 = vpop.xlane.xlu0 %29
    %v31 = vsel %vm15, %v27, 0.0
    %32 = vadd.xlane.f32.xlu0 %v31
    %v33 = vpop.xlane.xlu0 %32
    %v34 = vlog2.pop %v30
    %v35 = vmul.f32 %v34, 0.6931472
    %v36 = vlog2.pop %v33
    %v37 = vmul.f32 %v36, 0.6931472
    %v38 = vadd.f32 %v18, %v35
    %v39 = vadd.f32 %v21, %v37
    %v40 = vlaneseq
    %v41 = vand.u32 %v40, 127
    %42 = vset.pattern.permute.xlu0 0
    %43 = vperm.xlu0 %42, %v13
    %v44 = vpop.permute.xlu0 %43
    %45 = vset.pattern.permute.xlu0 0
    %46 = vperm.xlu0 %45, %v14
    %v47 = vpop.permute.xlu0 %46
    %vm48 = vcmp.eq.s32.totalorder %v41, %v44
    %vm49 = vcmp.eq.s32.totalorder %v41, %v47
    %v50 = vsel %vm48, %v11, 0.0
    %v51 = vsel %vm49, %v12, 0.0
    %v52 = vsel %vm15, %v50, 0.0
    %53 = vadd.xlane.f32.xlu0 %v52
    %v54 = vpop.xlane.xlu0 %53
    %v55 = vsel %vm15, %v51, 0.0
    %56 = vadd.xlane.f32.xlu0 %v55
    %v57 = vpop.xlane.xlu0 %56
    %v58 = vsub.f32 %v38, %v54
    %v59 = vsub.f32 %v39, %v57
    %v60 = vlaneseq
    %v61 = vshrl.u32 %v60, 7
    %v62 = vadd.s32 %v61, 8
    %s63 = smul.u32 0, 16
    %v64 = vstv %s63
    %v65 = vadd.s32 %v61, %v64
    %v66 = vadd.s32 %v62, %v64
    %vm67 = vcmp.lt.s32.totalorder %v65, 8
    %vm68 = vcmp.lt.s32.totalorder %v66, 8
    %v69 = vsel %vm67, %v58, 0.0
    %v70 = vsel %vm68, %v59, 0.0
    %vm71 = vcmask 7168
    %72 = vst.msk [vmem:[#allocation2] sm:$0xff] %vm71, %v69
    %73 = vst.msk [vmem:[#allocation2 + $0x8] sm:$0xff] %vm71, %v70
    // Predicated region
    $region10: #{tpu_custom_call.1} parent=1 // pred_check
      _
    $region11: #{tpu_custom_call.1} parent=1 // pred_check_branch
      %75 = sbr.rel (0) target = $region13
    $region12: #{tpu_custom_call.1} parent=1 // pred_region
      // Predicated region
      $region14: #{tpu_custom_call.1} parent=12 // pred_check
        _
      $region15: #{tpu_custom_call.1} parent=12 // pred_check_branch
        %77 = sbr.rel (0) target = $region17
      $region16: #{tpu_custom_call.1} parent=12 // pred_region
        // Predicated region
        $region18: #{tpu_custom_call.1} parent=16 // pred_check
          _
        $region19: #{tpu_custom_call.1} parent=16 // pred_check_branch
          %79 = sbr.rel (0) target = $region21
        $region20: #{tpu_custom_call.1} parent=16 // pred_region
          // Predicated region
          $region33: #{tpu_custom_call.1} parent=20 // pred_check
            _
          $region34: #{tpu_custom_call.1} parent=20 // pred_check_branch
            %95 = sbr.rel (0) target = $region36
          $region35: #{tpu_custom_call.1} parent=20 // pred_region
            loop: start=0, step=1, limit=1
            $region37: #{tpu_custom_call.1} parent=35 // loop_pre_header
              _
            $region38: #{tpu_custom_call.1} parent=35 // loop_header
              %s97 = sphi 0, %s101
              %p98 = scmp.ge.s32.totalorder %s97, 1
              %s102 = sphi [#allocation2], [#allocation2]
              %s103 = sphi %s2, %s2
            $region39: #{tpu_custom_call.1} parent=35 // loop_header_branch
              %100 = sbr.rel (%p98) target = $region43
            $region40: #{tpu_custom_call.1} parent=35 // loop_body
              %v104 = vld [vmem:[%s102] sm:$0xff]
              %105 = vst [vmem:[%s103] sm:$0xff] %v104
            $region41: #{tpu_custom_call.1} parent=35 // loop_footer
              %s101 = sadd.s32 1, %s97
            $region42: #{tpu_custom_call.1} parent=35 // loop_footer_branch
              %96 = sbr.rel target = $region38
            $region43: #{tpu_custom_call.1} parent=35 // loop_exit
              _
          $region36: #{tpu_custom_call.1} parent=20 // pred_fallthru
            _
          // Predicated region
          $region44: #{tpu_custom_call.1} parent=20 // pred_check
            _
          $region45: #{tpu_custom_call.1} parent=20 // pred_check_branch
            %107 = sbr.rel target = $region47
          $region46: #{tpu_custom_call.1} parent=20 // pred_region
            _
          $region47: #{tpu_custom_call.1} parent=20 // pred_fallthru
            _
        $region21: #{tpu_custom_call.1} parent=16 // pred_fallthru
          _
        // Predicated region
        $region22: #{tpu_custom_call.1} parent=16 // pred_check
          _
        $region23: #{tpu_custom_call.1} parent=16 // pred_check_branch
          %81 = sbr.rel target = $region25
        $region24: #{tpu_custom_call.1} parent=16 // pred_region
          %s83 = ssub.s32 256, 1
          loop: start=0, step=1, limit=1
          $region26: #{tpu_custom_call.1} parent=24 // loop_pre_header
            _
          $region27: #{tpu_custom_call.1} parent=24 // loop_header
            %s85 = sphi 0, %s89
            %p86 = scmp.ge.s32.totalorder %s85, 1
            %s90 = sphi [#allocation2], [#allocation2]
            %s91 = sphi %s2, %s2
          $region28: #{tpu_custom_call.1} parent=24 // loop_header_branch
            %88 = sbr.rel (%p86) target = $region32
          $region29: #{tpu_custom_call.1} parent=24 // loop_body
            %v92 = vld [vmem:[%s90] sm:%s83]
            %93 = vst [vmem:[%s91] sm:%s83] %v92
          $region30: #{tpu_custom_call.1} parent=24 // loop_footer
            %s89 = sadd.s32 1, %s85
          $region31: #{tpu_custom_call.1} parent=24 // loop_footer_branch
            %84 = sbr.rel target = $region27
          $region32: #{tpu_custom_call.1} parent=24 // loop_exit
            _
        $region25: #{tpu_custom_call.1} parent=16 // pred_fallthru
          _
      $region17: #{tpu_custom_call.1} parent=12 // pred_fallthru
        _
      %108 = vnop
    $region13: #{tpu_custom_call.1} parent=1 // pred_fallthru
      _
    // Predicated region
    $region48: #{tpu_custom_call.1} parent=1 // pred_check
      _
    $region49: #{tpu_custom_call.1} parent=1 // pred_check_branch
      %110 = sbr.rel (0) target = $region51
    $region50: #{tpu_custom_call.1} parent=1 // pred_region
      _
    $region51: #{tpu_custom_call.1} parent=1 // pred_fallthru
      _

</llo_original>
